<compile_context>
chip_gen: v6e
topology: v6e:2x2x1
jax: 0.10.0
libtpu: 0.0.40
codegen_flags: <defaults>
</compile_context>

<pallas_src>
import jax
import jax.numpy as jnp
from jax import lax
from jax.experimental import pallas as pl
from jax.experimental.pallas import tpu as pltpu


def skip_conv3x3_kernel(x_ref, m_ref, b_ref, o_ref):
    # x_ref: (1, H, W*C)        input, channels folded into the lane axis
    # m_ref: (3, W*C, W*C)      band matrices (kx taps + channel mix + residual)
    # b_ref: (1, W*C)           bias, pre-tiled across W
    # o_ref: (1, H, W*C)        output = x + conv3x3(x) + bias
    H = x_ref.shape[1]
    WC = x_ref.shape[2]

    x = x_ref[0].astype(jnp.float32)                                 # (H, WC)

    # Accumulator initialised with the broadcast bias (lane-dense f32).
    acc = jnp.broadcast_to(b_ref[...].astype(jnp.float32), (H, WC))

    # ky = 1 (same row): this band matrix also carries the +x residual identity.
    acc = acc + jnp.dot(x, m_ref[1], preferred_element_type=jnp.float32)

    # ky = 0 / ky = 2 read the row above / below.
    y0 = jnp.dot(x, m_ref[0], preferred_element_type=jnp.float32)    # needed at row h-1
    y2 = jnp.dot(x, m_ref[2], preferred_element_type=jnp.float32)    # needed at row h+1

    # One-row shift with an implicit zero halo at the image border, expressed
    # as an off-diagonal identity so it rides the (otherwise idle) MXU and
    # needs no sublane/lane relayout or masked partial stores.
    r = lax.broadcasted_iota(jnp.int32, (H, H), 0)
    c = lax.broadcasted_iota(jnp.int32, (H, H), 1)
    shift_dn = jnp.where(c == r - 1, 1.0, 0.0).astype(jnp.float32)   # (S@y)[h]=y[h-1], 0 at h=0
    shift_up = jnp.where(c == r + 1, 1.0, 0.0).astype(jnp.float32)   # (S@y)[h]=y[h+1], 0 at h=H-1

    acc = acc + jnp.dot(shift_dn, y0, preferred_element_type=jnp.float32)
    acc = acc + jnp.dot(shift_up, y2, preferred_element_type=jnp.float32)

    o_ref[0] = acc.astype(o_ref.dtype)


def skip_connection_conv3x3(x_nchw, w_oihw, b):
    """forward(x) = x + conv3x3(x) + bias, NCHW in / NCHW out."""
    N, C, H, W = x_nchw.shape
    Cout = w_oihw.shape[0]
    assert Cout == C, "SkipConnection requires module(x) to match x's shape"

    # Layout plumbing stays in the wrapper: NCHW -> (N, H, W*C), lane axis W*C.
    x_fold = jnp.transpose(x_nchw, (0, 2, 3, 1)).reshape(N, H, W * C)

    # Band matrices, one per ky tap:
    #   M[ky][(w+kx-1)*C + ci, w*Cout + co] = w[co, ci, ky, kx]
    # Out-of-range w+kx-1 rows are simply absent -> zero "SAME" padding along W
    # is implicit.  The SkipConnection residual (+x) is an identity folded into
    # the un-shifted (ky=1) matrix.
    w_f = w_oihw.astype(jnp.float32)
    mats = []
    for ky in range(3):
        m = jnp.zeros((W * C, W * Cout), jnp.float32)
        for kx in range(3):
            # shift[w_in, w_out] = 1  iff  w_in == w_out + (kx - 1)
            shift = jnp.eye(W, k=-(kx - 1), dtype=jnp.float32)
            m = m + jnp.kron(shift, w_f[:, :, ky, kx].T)             # (W*C, W*Cout)
        mats.append(m)
    mats[1] = mats[1] + jnp.eye(W * C, dtype=jnp.float32)            # residual
    m_all = jnp.stack(mats, axis=0)                                  # (3, W*C, W*Cout)

    bias_row = jnp.tile(b.astype(jnp.float32), W).reshape(1, W * Cout)

    out_fold = pl.pallas_call(
        skip_conv3x3_kernel,
        out_shape=jax.ShapeDtypeStruct((N, H, W * Cout), x_nchw.dtype),
        grid=(N,),  # one image per step; "parallel" so both v7x TCs get work
        in_specs=[
            pl.BlockSpec((1, H, W * C), lambda n: (n, 0, 0)),
            pl.BlockSpec((3, W * C, W * Cout), lambda n: (0, 0, 0)),
            pl.BlockSpec((1, W * Cout), lambda n: (0, 0)),
        ],
        out_specs=pl.BlockSpec((1, H, W * Cout), lambda n: (n, 0, 0)),
        compiler_params=pltpu.CompilerParams(dimension_semantics=("parallel",)),
    )(x_fold, m_all, bias_row)

    return jnp.transpose(out_fold.reshape(N, H, W, Cout), (0, 3, 1, 2))


def _reference(x_nchw, w_oihw, b):
    y = lax.conv_general_dilated(
        x_nchw, w_oihw,
        window_strides=(1, 1), padding="SAME",
        dimension_numbers=("NCHW", "OIHW", "NCHW"),
        precision=lax.Precision.HIGHEST,
    )
    y = y + b[None, :, None, None]
    return x_nchw + y


if __name__ == "__main__":
    key = jax.random.PRNGKey(0)
    k_x, k_w, k_b = jax.random.split(key, 3)

    N, C, H, W = 2, 4, 16, 16
    x = jax.random.normal(k_x, (N, C, H, W), dtype=jnp.float32)
    w = jax.random.normal(k_w, (C, C, 3, 3), dtype=jnp.float32) * 0.1
    b = jax.random.normal(k_b, (C,), dtype=jnp.float32) * 0.1

    out = skip_connection_conv3x3(x, w, b)
    out = jax.block_until_ready(out)

    ref = _reference(x, w, b)
    assert out.shape == ref.shape and out.dtype == ref.dtype
    assert jnp.allclose(out, ref, atol=1e-4, rtol=1e-4)

    print("KERNEL_OK")
</pallas_src>

<mosaic_0001>
module attributes {stable_mosaic.version = 11 : i64} {
  func.func @skip_conv3x3_kernel(%arg0: i32, %arg1: memref<1x16x64xf32, #tpu.memory_space<vmem>>, %arg2: memref<3x64x64xf32, #tpu.memory_space<vmem>>, %arg3: memref<1x64xf32, #tpu.memory_space<vmem>>, %arg4: memref<1x16x64xf32, #tpu.memory_space<vmem>>) attributes {dimension_semantics = [#tpu.dimension_semantics<parallel>], iteration_bounds = array<i64: 2>, scalar_prefetch = 0 : i64, scratch_operands = 0 : i64, tpu.core_type = #tpu.core_type<tc>, window_params = [{transform_indices = @transform_0, window_bounds = array<i64: 1, 16, 64>}, {pipeline_mode = #tpu.pipeline_mode<synchronous>, transform_indices = @transform_1, window_bounds = array<i64: 3, 64, 64>}, {pipeline_mode = #tpu.pipeline_mode<synchronous>, transform_indices = @transform_2, window_bounds = array<i64: 1, 64>}, {transform_indices = @transform_3, window_bounds = array<i64: 1, 16, 64>}]} {
    %c0 = arith.constant 0 : index
    %c0_0 = arith.constant 0 : index
    %c0_1 = arith.constant 0 : index
    %0 = vector.load %arg1[%c0, %c0_0, %c0_1] : memref<1x16x64xf32, #tpu.memory_space<vmem>>, vector<1x16x64xf32>
    %1 = vector.shape_cast %0 : vector<1x16x64xf32> to vector<16x64xf32>
    %c0_2 = arith.constant 0 : index
    %c0_3 = arith.constant 0 : index
    %2 = vector.load %arg3[%c0_2, %c0_3] : memref<1x64xf32, #tpu.memory_space<vmem>>, vector<1x64xf32>
    %3 = vector.shape_cast %2 : vector<1x64xf32> to vector<1x64xf32>
    %4 = vector.broadcast %3 : vector<1x64xf32> to vector<16x64xf32>
    %c1 = arith.constant 1 : index
    %c0_4 = arith.constant 0 : index
    %c0_5 = arith.constant 0 : index
    %5 = vector.load %arg2[%c1, %c0_4, %c0_5] : memref<3x64x64xf32, #tpu.memory_space<vmem>>, vector<1x64x64xf32>
    %6 = vector.shape_cast %5 : vector<1x64x64xf32> to vector<64x64xf32>
    %cst = arith.constant dense<0.000000e+00> : vector<16x64xf32>
    %7 = tpu.matmul %1, %6, %cst {dimension_numbers = #tpu.dot_dimension_numbers<[1], [0], [0], [1], [0, 0, 1, 1], [], []>} : vector<16x64xf32>, vector<64x64xf32>, vector<16x64xf32> -> vector<16x64xf32>
    %8 = arith.addf %4, %7 : vector<16x64xf32>
    %c0_6 = arith.constant 0 : index
    %c0_7 = arith.constant 0 : index
    %c0_8 = arith.constant 0 : index
    %9 = vector.load %arg2[%c0_6, %c0_7, %c0_8] : memref<3x64x64xf32, #tpu.memory_space<vmem>>, vector<1x64x64xf32>
    %10 = vector.shape_cast %9 : vector<1x64x64xf32> to vector<64x64xf32>
    %cst_9 = arith.constant dense<0.000000e+00> : vector<16x64xf32>
    %11 = tpu.matmul %1, %10, %cst_9 {dimension_numbers = #tpu.dot_dimension_numbers<[1], [0], [0], [1], [0, 0, 1, 1], [], []>} : vector<16x64xf32>, vector<64x64xf32>, vector<16x64xf32> -> vector<16x64xf32>
    %c2 = arith.constant 2 : index
    %c0_10 = arith.constant 0 : index
    %c0_11 = arith.constant 0 : index
    %12 = vector.load %arg2[%c2, %c0_10, %c0_11] : memref<3x64x64xf32, #tpu.memory_space<vmem>>, vector<1x64x64xf32>
    %13 = vector.shape_cast %12 : vector<1x64x64xf32> to vector<64x64xf32>
    %cst_12 = arith.constant dense<0.000000e+00> : vector<16x64xf32>
    %14 = tpu.matmul %1, %13, %cst_12 {dimension_numbers = #tpu.dot_dimension_numbers<[1], [0], [0], [1], [0, 0, 1, 1], [], []>} : vector<16x64xf32>, vector<64x64xf32>, vector<16x64xf32> -> vector<16x64xf32>
    %15 = tpu.iota {dimensions = array<i32: 0>} : vector<16x16xi32>
    %16 = tpu.iota {dimensions = array<i32: 1>} : vector<16x16xi32>
    %c1_i32 = arith.constant 1 : i32
    %17 = vector.broadcast %c1_i32 : i32 to vector<16x16xi32>
    %18 = arith.subi %15, %17 : vector<16x16xi32>
    %19 = arith.cmpi eq, %16, %18 : vector<16x16xi32>
    %cst_13 = arith.constant 1.000000e+00 : f32
    %cst_14 = arith.constant 0.000000e+00 : f32
    %20 = vector.broadcast %cst_13 : f32 to vector<16x16xf32>
    %21 = vector.broadcast %cst_14 : f32 to vector<16x16xf32>
    %22 = arith.select %19, %20, %21 : vector<16x16xi1>, vector<16x16xf32>
    %c1_i32_15 = arith.constant 1 : i32
    %23 = vector.broadcast %c1_i32_15 : i32 to vector<16x16xi32>
    %24 = arith.addi %15, %23 : vector<16x16xi32>
    %25 = arith.cmpi eq, %16, %24 : vector<16x16xi32>
    %cst_16 = arith.constant 1.000000e+00 : f32
    %cst_17 = arith.constant 0.000000e+00 : f32
    %26 = vector.broadcast %cst_16 : f32 to vector<16x16xf32>
    %27 = vector.broadcast %cst_17 : f32 to vector<16x16xf32>
    %28 = arith.select %25, %26, %27 : vector<16x16xi1>, vector<16x16xf32>
    %cst_18 = arith.constant dense<0.000000e+00> : vector<16x64xf32>
    %29 = tpu.matmul %22, %11, %cst_18 {dimension_numbers = #tpu.dot_dimension_numbers<[1], [0], [0], [1], [0, 0, 1, 1], [], []>} : vector<16x16xf32>, vector<16x64xf32>, vector<16x64xf32> -> vector<16x64xf32>
    %30 = arith.addf %8, %29 : vector<16x64xf32>
    %cst_19 = arith.constant dense<0.000000e+00> : vector<16x64xf32>
    %31 = tpu.matmul %28, %14, %cst_19 {dimension_numbers = #tpu.dot_dimension_numbers<[1], [0], [0], [1], [0, 0, 1, 1], [], []>} : vector<16x16xf32>, vector<16x64xf32>, vector<16x64xf32> -> vector<16x64xf32>
    %32 = arith.addf %30, %31 : vector<16x64xf32>
    %c0_20 = arith.constant 0 : index
    %c0_21 = arith.constant 0 : index
    %c0_22 = arith.constant 0 : index
    %33 = vector.load %arg4[%c0_20, %c0_21, %c0_22] : memref<1x16x64xf32, #tpu.memory_space<vmem>>, vector<1x16x64xf32>
    %34 = vector.shape_cast %33 : vector<1x16x64xf32> to vector<16x64xf32>
    %35 = vector.shape_cast %32 : vector<16x64xf32> to vector<1x16x64xf32>
    tpu.vector_store %arg4[%c0_20, %c0_21, %c0_22], %35 {strides = array<i32>} : memref<1x16x64xf32, #tpu.memory_space<vmem>>, vector<1x16x64xf32>,
    return
  }
  func.func @transform_0(%arg0: i32) -> (i32, i32, i32) {
    %c0_i32 = arith.constant 0 : i32
    %c0_i32_0 = arith.constant 0 : i32
    %c0_i32_1 = arith.constant 0 : i32
    return %arg0, %c0_i32, %c0_i32_0 : i32, i32, i32
  }
  func.func @transform_1(%arg0: i32) -> (i32, i32, i32) {
    %c0_i32 = arith.constant 0 : i32
    %c0_i32_0 = arith.constant 0 : i32
    %c0_i32_1 = arith.constant 0 : i32
    %c0_i32_2 = arith.constant 0 : i32
    return %c0_i32, %c0_i32_0, %c0_i32_1 : i32, i32, i32
  }
  func.func @transform_2(%arg0: i32) -> (i32, i32) {
    %c0_i32 = arith.constant 0 : i32
    %c0_i32_0 = arith.constant 0 : i32
    %c0_i32_1 = arith.constant 0 : i32
    return %c0_i32, %c0_i32_0 : i32, i32
  }
  func.func @transform_3(%arg0: i32) -> (i32, i32, i32) {
    %c0_i32 = arith.constant 0 : i32
    %c0_i32_0 = arith.constant 0 : i32
    %c0_i32_1 = arith.constant 0 : i32
    return %arg0, %c0_i32, %c0_i32_0 : i32, i32, i32
  }
}

</mosaic_0001>

<llo_original>
// kernel: tpu_custom_call.1
$region0: #{tpu_custom_call.1}
  #allocation0 [shape = 'u32[]', space=smem, size = 0x4, offset = 0x4, fixed_abs, tag = 'smem constant byte address 0x4 - core index']
  #allocation1 [shape = 'u32[144,128]{1,0:T(1,128)}', space=vmem, size = 0x12000, scoped, tag = 'internal scratch']
  %s0 = inlined_call_operand.hbm [shape: f32[2,16,64], index: 0, kind: input, shape index: {}]
  %s1 = inlined_call_operand.hbm [shape: f32[3,64,64], index: 1, kind: input, shape index: {}]
  %s2 = inlined_call_operand.vmem [shape: f32[1,64], index: 2, kind: input, shape index: {}]
  %s3 = inlined_call_operand.hbm [shape: f32[2,16,64], index: 3, kind: output, shape index: {}]
  %s4 = sld [smem:[#allocation0]]
  $region53: #{tpu_custom_call.1} parent=0
    _
  %s6 = ssub.s32 1, %s4
  %s7 = scalar_select 0, %s6, %s4
  $region1: #{tpu_custom_call.1} parent=0
    #allocation2 [shape = 'u8[16384]{0}', space=vmem, size = 0x4000, scoped, tag = 'input window, operand 0']
    #allocation3 [shape = 's32[2]{0}', space=sflag, size = 0x8, scoped, tag = 'scoped memory for tpu_custom_call.1']
    #allocation4 [shape = 's32[2]{0}', space=sflag, size = 0x8, scoped, tag = 'scoped memory for tpu_custom_call.1']
    #allocation5 [shape = 'u8[98304]{0}', space=vmem, size = 0x18000, scoped, tag = 'input window, operand 1, single buffered']
    #allocation6 [shape = 's32[1]{0}', space=sflag, size = 0x4, scoped, tag = 'scoped memory for tpu_custom_call.1']
    #allocation7 [shape = 'u8[16384]{0}', space=vmem, size = 0x4000, scoped, tag = 'output window, operand 0']
    %8 = vsyncpa [#allocation3], 0
    %s9 = scalar_lea.sflag [#allocation3], 1
    %10 = vsyncpa %s9, 0
    %11 = vsyncpa [#allocation6], 0
    %12 = vsyncpa [#allocation4], 0
    %s13 = scalar_lea.sflag [#allocation4], 1
    %14 = vsyncpa %s13, 0
    loop: start=0, step=1, limit=4
    $region2: #{tpu_custom_call.1} parent=1 // loop_pre_header
      _
    $region3: #{tpu_custom_call.1} parent=1 // loop_header
      %s16 = sphi 0, %s20
      %p17 = scmp.ge.s32.totalorder %s16, 4
      %s26 = sphi 0, %s28
      %s29 = sphi 0, %s26
      %s30 = sphi 0, %s29
      %s46 = sphi 0, %s30
      %s50 = sphi 0, %s50
      %s52 = sphi 0, %s50
      %s53 = sphi 0, %s52
      %s67 = sphi 0, %s53
      %s71 = sphi 0, %s71
      %s73 = sphi 0, %s71
      %s74 = sphi 0, %s73
      %s88 = sphi 0, %s74
      %s94 = sphi 0, %s96
      %s97 = sphi 0, %s94
      %s98 = sphi 0, %s97
      %s114 = sphi 0, %s98
    $region4: #{tpu_custom_call.1} parent=1 // loop_header_branch
      %19 = sbr.rel (%p17) target = $region8
    $region5: #{tpu_custom_call.1} parent=1 // loop_body
      %s21 = ssub.s32 %s16, 1
      %s22 = ssub.s32 %s16, 2
      %s23 = sadd.s32 %s16, 1
      %s24 = ssub.s32 %s16, %s23
      %p25 = scmp.eq.s32.totalorder %s24, 0
      %s27 = sadd.s32 %s26, 1
      %s28 = scalar_select %p25, %s26, %s27
      %p31 = pneg %p25
      %p32 = scmp.eq.s32.totalorder %s16, 1
      %p33 = por %p31, %p32
      %p34 = scmp.ne.s32.totalorder %s26, %s29
      %p35 = scmp.eq.s32.totalorder %s16, 0
      %p36 = por %p34, %p35
      %p37 = scmp.ne.s32.totalorder %s26, %s29
      %p38 = scmp.eq.s32.totalorder %s21, 1
      %p39 = por %p37, %p38
      %p40 = scmp.ne.s32.totalorder %s29, %s30
      %p41 = scmp.eq.s32.totalorder %s21, 0
      %p42 = por %p40, %p41
      %p43 = scmp.ne.s32.totalorder %s29, %s30
      %p44 = scmp.eq.s32.totalorder %s22, 1
      %p45 = por %p43, %p44
      %p47 = scmp.ne.s32.totalorder %s30, %s46
      %p48 = scmp.eq.s32.totalorder %s22, 0
      %p49 = por %p47, %p48
      %s51 = sadd.s32 %s50, 1
      %p54 = scmp.eq.s32.totalorder %s16, 1
      %p55 = scmp.ne.s32.totalorder %s50, %s52
      %p56 = scmp.eq.s32.totalorder %s16, 0
      %p57 = por %p55, %p56
      %p58 = scmp.ne.s32.totalorder %s50, %s52
      %p59 = scmp.eq.s32.totalorder %s21, 1
      %p60 = por %p58, %p59
      %p61 = scmp.ne.s32.totalorder %s52, %s53
      %p62 = scmp.eq.s32.totalorder %s21, 0
      %p63 = por %p61, %p62
      %p64 = scmp.ne.s32.totalorder %s52, %s53
      %p65 = scmp.eq.s32.totalorder %s22, 1
      %p66 = por %p64, %p65
      %p68 = scmp.ne.s32.totalorder %s53, %s67
      %p69 = scmp.eq.s32.totalorder %s22, 0
      %p70 = por %p68, %p69
      %s72 = sadd.s32 %s71, 1
      %p75 = scmp.eq.s32.totalorder %s16, 1
      %p76 = scmp.ne.s32.totalorder %s71, %s73
      %p77 = scmp.eq.s32.totalorder %s16, 0
      %p78 = por %p76, %p77
      %p79 = scmp.ne.s32.totalorder %s71, %s73
      %p80 = scmp.eq.s32.totalorder %s21, 1
      %p81 = por %p79, %p80
      %p82 = scmp.ne.s32.totalorder %s73, %s74
      %p83 = scmp.eq.s32.totalorder %s21, 0
      %p84 = por %p82, %p83
      %p85 = scmp.ne.s32.totalorder %s73, %s74
      %p86 = scmp.eq.s32.totalorder %s22, 1
      %p87 = por %p85, %p86
      %p89 = scmp.ne.s32.totalorder %s74, %s88
      %p90 = scmp.eq.s32.totalorder %s22, 0
      %p91 = por %p89, %p90
      %s92 = ssub.s32 %s16, %s23
      %p93 = scmp.eq.s32.totalorder %s92, 0
      %s95 = sadd.s32 %s94, 1
      %s96 = scalar_select %p93, %s94, %s95
      %p99 = pneg %p93
      %p100 = scmp.eq.s32.totalorder %s16, 1
      %p101 = por %p99, %p100
      %p102 = scmp.ne.s32.totalorder %s94, %s97
      %p103 = scmp.eq.s32.totalorder %s16, 0
      %p104 = por %p102, %p103
      %p105 = scmp.ne.s32.totalorder %s94, %s97
      %p106 = scmp.eq.s32.totalorder %s21, 1
      %p107 = por %p105, %p106
      %p108 = scmp.ne.s32.totalorder %s97, %s98
      %p109 = scmp.eq.s32.totalorder %s21, 0
      %p110 = por %p108, %p109
      %p111 = scmp.ne.s32.totalorder %s97, %s98
      %p112 = scmp.eq.s32.totalorder %s22, 1
      %p113 = por %p111, %p112
      %p115 = scmp.ne.s32.totalorder %s98, %s114
      %p116 = scmp.eq.s32.totalorder %s22, 0
      %p117 = por %p115, %p116
      %p118 = scmp.le.s32.totalorder 1, %s16
      %p119 = scmp.lt.s32.totalorder %s16, 3
      %p120 = pnand %p118, %p119
      %p121 = pneg %p120
      // Predicated region
      $region9: #{tpu_custom_call.1} parent=5 // pred_check
        _
      $region10: #{tpu_custom_call.1} parent=5 // pred_check_branch
        %123 = sbr.rel (%p120) target = $region12
      $region11: #{tpu_custom_call.1} parent=5 // pred_region
        %s124 = ssub.s32 %s16, 1
        // Predicated region
        $region13: #{tpu_custom_call.1} parent=11 // pred_check
          %p125 = pneg %p63
        $region14: #{tpu_custom_call.1} parent=11 // pred_check_branch
          %127 = sbr.rel (%p125) target = $region16
        $region15: #{tpu_custom_call.1} parent=11 // pred_region
          %s129 = ssub.s32 3072, 3072
          %130 = vsyncadd [#allocation6], %s129
          %s131 = sshll.u32 [#allocation5], 4
          %s132 = int_to_ptr.vmem [resolvable:$true] %s131
          %137 = dma.hbm_to_vmem [thread:$0]  %s1, 3072, %s132, [#allocation6], 128, 128, 8
        $region16: #{tpu_custom_call.1} parent=11 // pred_fallthru
          _
        // Predicated region
        $region17: #{tpu_custom_call.1} parent=11 // pred_check
          %p138 = pneg %p84
        $region18: #{tpu_custom_call.1} parent=11 // pred_check_branch
          %140 = sbr.rel (%p138) target = $region20
        $region19: #{tpu_custom_call.1} parent=11 // pred_region
          _
        $region20: #{tpu_custom_call.1} parent=11 // pred_fallthru
          _
      $region12: #{tpu_custom_call.1} parent=5 // pred_fallthru
        _
      %p141 = scmp.lt.s32.totalorder %s16, 2
      // Predicated region
      $region21: #{tpu_custom_call.1} parent=5 // pred_check
        %p142 = pneg %p141
      $region22: #{tpu_custom_call.1} parent=5 // pred_check_branch
        %144 = sbr.rel (%p142) target = $region24
      $region23: #{tpu_custom_call.1} parent=5 // pred_region
        // Predicated region
        $region25: #{tpu_custom_call.1} parent=23 // pred_check
          %p145 = pneg %p36
        $region26: #{tpu_custom_call.1} parent=23 // pred_check_branch
          %147 = sbr.rel (%p145) target = $region28
        $region27: #{tpu_custom_call.1} parent=23 // pred_region
          %s148 = sand.u32 %s26, 1
          %s149 = scalar_lea.sflag [#allocation3], %s148
          %s150 = sand.u32 %s26, 1
          %s151 = smul.addr %s150, 16
          %s152 = scalar_lea.vmem [#allocation2], %s151
          %s154 = ssub.s32 256, 256
          %155 = vsyncadd %s149, %s154
          %s156 = smul.addr %s16, 2
          %s157 = smul.addr %s156, 128
          %s158 = scalar_lea.hbm %s0, %s157
          %s159 = sshll.u32 %s152, 4
          %s160 = int_to_ptr.vmem [resolvable:$true] %s159
          %165 = dma.hbm_to_vmem [thread:$0]  %s158, 256, %s160, %s149, 128, 128, 8
        $region28: #{tpu_custom_call.1} parent=23 // pred_fallthru
          _
      $region24: #{tpu_custom_call.1} parent=5 // pred_fallthru
        _
      %p166 = scmp.le.s32.totalorder 1, %s16
      %p167 = scmp.lt.s32.totalorder %s16, 3
      %p168 = pnand %p166, %p167
      %p169 = pneg %p168
      // Predicated region
      $region29: #{tpu_custom_call.1} parent=5 // pred_check
        _
      $region30: #{tpu_custom_call.1} parent=5 // pred_check_branch
        %171 = sbr.rel (%p168) target = $region32
      $region31: #{tpu_custom_call.1} parent=5 // pred_region
        %s172 = ssub.s32 %s16, 1
        %s173 = sand.u32 %s29, 1
        %s174 = scalar_lea.sflag [#allocation3], %s173
        %s175 = sand.u32 %s29, 1
        %s176 = smul.addr %s175, 16
        %s177 = scalar_lea.vmem [#allocation2], %s176
        // Predicated region
        $region33: #{tpu_custom_call.1} parent=31 // pred_check
          %p178 = pneg %p42
        $region34: #{tpu_custom_call.1} parent=31 // pred_check_branch
          %180 = sbr.rel (%p178) target = $region36
        $region35: #{tpu_custom_call.1} parent=31 // pred_region
          %181 = dma.done %s174, 256
        $region36: #{tpu_custom_call.1} parent=31 // pred_fallthru
          _
        // Predicated region
        $region37: #{tpu_custom_call.1} parent=31 // pred_check
          %p182 = pneg %p63
        $region38: #{tpu_custom_call.1} parent=31 // pred_check_branch
          %184 = sbr.rel (%p182) target = $region40
        $region39: #{tpu_custom_call.1} parent=31 // pred_region
          %185 = dma.done [#allocation6], 3072
        $region40: #{tpu_custom_call.1} parent=31 // pred_fallthru
          _
        %s186 = sand.u32 %s29, 1
        %s187 = scalar_lea.sflag [#allocation3], %s186
        %s188 = sand.u32 %s29, 1
        %s189 = smul.addr %s188, 16
        %s190 = scalar_lea.vmem [#allocation2], %s189
        %p191 = pneg %p42
        %p192 = pneg %p39
        %p193 = pneg %p63
        %p194 = pneg %p60
        %p195 = pneg %p84
        %p196 = pneg %p81
        %p197 = pneg %p110
        %p198 = pneg %p107
        %s199 = sand.u32 %s97, 1
        %s200 = scalar_lea.sflag [#allocation4], %s199
        %s201 = sand.u32 %s97, 1
        %s202 = smul.addr %s201, 16
        %s203 = scalar_lea.vmem [#allocation7], %s202
        %v204 = vld [vmem:[%s177] sm:$0xff]
        %v205 = vld [vmem:[%s177 + $0x8] sm:$0xff]
        %v206 = vld [vmem:[%s2] sm:$0x1]
        %v208 = vlaneseq
        %v209 = vshrl.u32 %v208, 7
        %v210 = vsub.s32 0, %v209
        %v211 = vrot.slane %v206, %v210
        %s213 = scalar_lea.vmem [#allocation5], 64
        %v214 = vld [vmem:[%s213] sm:$0xff]
        %v215 = vld [vmem:[%s213 + $0x8] sm:$0xff]
        %v216 = vld [vmem:[%s213 + $0x10] sm:$0xff]
        %v217 = vld [vmem:[%s213 + $0x18] sm:$0xff]
        %v218 = vld [vmem:[%s213 + $0x20] sm:$0xff]
        %v219 = vld [vmem:[%s213 + $0x28] sm:$0xff]
        %v220 = vld [vmem:[%s213 + $0x30] sm:$0xff]
        %v221 = vld [vmem:[%s213 + $0x38] sm:$0xff]
        %vm222 = vcmask 523264
        %v224 = vsel %vm222, %v204, 0
        %v227 = vsel %vm222, %v205, 0
        %229 = vmatprep.subr.mxu0 0.0
        %230 = vmatpush1.msra.mxu0 0.0
        %231 = vmatprep.subr.mxu0 0.0
        %232 = vmatpush1.msra.mxu0 0.0
        %233 = vmatprep.subr.mxu0 0.0
        %234 = vmatpush1.msra.mxu0 0.0
        %235 = vmatprep.subr.mxu0 0.0
        %236 = vmatpush1.msra.mxu0 0.0
        %237 = vmatprep.subr.mxu0 0.0
        %238 = vmatpush1.msra.mxu0 0.0
        %239 = vmatprep.subr.mxu0 0.0
        %240 = vmatpush1.msra.mxu0 0.0
        %241 = vmatprep.subr.mxu0 0.0
        %242 = vmatpush1.msra.mxu0 0.0
        %243 = vmatprep.subr.mxu0 0.0
        %244 = vmatpush1.msra.mxu0 0.0
        %245 = vmatprep.subr.mxu0 0.0
        %246 = vmatpush1.msra.mxu0 %v221
        %247 = vmatprep.subr.mxu0 0.0
        %248 = vmatpush1.msra.mxu0 %v220
        %249 = vmatprep.subr.mxu0 0.0
        %250 = vmatpush1.msra.mxu0 %v219
        %251 = vmatprep.subr.mxu0 0.0
        %252 = vmatpush1.msra.mxu0 %v218
        %253 = vmatprep.subr.mxu0 0.0
        %254 = vmatpush1.msra.mxu0 %v217
        %255 = vmatprep.subr.mxu0 0.0
        %256 = vmatpush1.msra.mxu0 %v216
        %257 = vmatprep.subr.mxu0 0.0
        %258 = vmatpush1.msra.mxu0 %v215
        %259 = vmatprep.subr.mxu0 0.0
        %260 = vmatpush1.msra.mxu0 %v214
        %261 = vmatprep.subr.mxu0 0.0
        %262 = vmatpush2.msra.mxu0 0.0
        %263 = vmatprep.subr.mxu0 0.0
        %264 = vmatpush2.msra.mxu0 0.0
        %265 = vmatprep.subr.mxu0 0.0
        %266 = vmatpush2.msra.mxu0 0.0
        %267 = vmatprep.subr.mxu0 0.0
        %268 = vmatpush2.msra.mxu0 0.0
        %269 = vmatprep.subr.mxu0 0.0
        %270 = vmatpush2.msra.mxu0 0.0
        %271 = vmatprep.subr.mxu0 0.0
        %272 = vmatpush2.msra.mxu0 0.0
        %273 = vmatprep.subr.mxu0 0.0
        %274 = vmatpush2.msra.mxu0 0.0
        %275 = vmatprep.subr.mxu0 0.0
        %276 = vmatpush2.msra.mxu0 0.0
        %277 = vmatprep.subr.mxu0 0.0
        %278 = vmatpush2.msra.mxu0 0.0
        %279 = vmatprep.subr.mxu0 0.0
        %280 = vmatpush2.msra.mxu0 0.0
        %281 = vmatprep.subr.mxu0 0.0
        %282 = vmatpush2.msra.mxu0 0.0
        %283 = vmatprep.subr.mxu0 0.0
        %284 = vmatpush2.msra.mxu0 0.0
        %285 = vmatprep.subr.mxu0 0.0
        %286 = vmatpush2.msra.mxu0 0.0
        %287 = vmatprep.subr.mxu0 0.0
        %288 = vmatpush2.msra.mxu0 0.0
        %289 = vmatprep.subr.mxu0 0.0
        %290 = vmatpush2.msra.mxu0 0.0
        %291 = vmatprep.subr.mxu0 0.0
        %292 = vmatpush2.msra.mxu0 0.0
        %293 = vmatprep.mubr.f32.mxu0 0.0
        %294 = vmatmul.mubr.f32.gmra.mxu0 %v224
        %v295 = vpop.f32.mrf.mxu0
        %v296 = vadd.f32 0.0, %v295
        %v297 = vpop.f32.mrf.mxu0
        %298 = vmatprep.mubr.f32.mxu0 0.0
        %299 = vmatmul.mubr.f32.gmra.mxu0 %v227
        %v300 = vpop.f32.mrf.mxu0
        %v301 = vadd.f32 0.0, %v300
        %v302 = vpop.f32.mrf.mxu0
        %303 = vdwg.mxu0
        %v304 = vadd.f32 %v211, %v296
        %v305 = vadd.f32 %v211, %v301
        %v306 = vld [vmem:[#allocation5] sm:$0xff]
        %v307 = vld [vmem:[#allocation5 + $0x8] sm:$0xff]
        %v308 = vld [vmem:[#allocation5 + $0x10] sm:$0xff]
        %v309 = vld [vmem:[#allocation5 + $0x18] sm:$0xff]
        %v310 = vld [vmem:[#allocation5 + $0x20] sm:$0xff]
        %v311 = vld [vmem:[#allocation5 + $0x28] sm:$0xff]
        %v312 = vld [vmem:[#allocation5 + $0x30] sm:$0xff]
        %v313 = vld [vmem:[#allocation5 + $0x38] sm:$0xff]
        %314 = vmatprep.subr.mxu0 0.0
        %315 = vmatpush1.msra.mxu0 0.0
        %316 = vmatprep.subr.mxu0 0.0
        %317 = vmatpush1.msra.mxu0 0.0
        %318 = vmatprep.subr.mxu0 0.0
        %319 = vmatpush1.msra.mxu0 0.0
        %320 = vmatprep.subr.mxu0 0.0
        %321 = vmatpush1.msra.mxu0 0.0
        %322 = vmatprep.subr.mxu0 0.0
        %323 = vmatpush1.msra.mxu0 0.0
        %324 = vmatprep.subr.mxu0 0.0
        %325 = vmatpush1.msra.mxu0 0.0
        %326 = vmatprep.subr.mxu0 0.0
        %327 = vmatpush1.msra.mxu0 0.0
        %328 = vmatprep.subr.mxu0 0.0
        %329 = vmatpush1.msra.mxu0 0.0
        %330 = vmatprep.subr.mxu0 0.0
        %331 = vmatpush1.msra.mxu0 %v313
        %332 = vmatprep.subr.mxu0 0.0
        %333 = vmatpush1.msra.mxu0 %v312
        %334 = vmatprep.subr.mxu0 0.0
        %335 = vmatpush1.msra.mxu0 %v311
        %336 = vmatprep.subr.mxu0 0.0
        %337 = vmatpush1.msra.mxu0 %v310
        %338 = vmatprep.subr.mxu0 0.0
        %339 = vmatpush1.msra.mxu0 %v309
        %340 = vmatprep.subr.mxu0 0.0
        %341 = vmatpush1.msra.mxu0 %v308
        %342 = vmatprep.subr.mxu0 0.0
        %343 = vmatpush1.msra.mxu0 %v307
        %344 = vmatprep.subr.mxu0 0.0
        %345 = vmatpush1.msra.mxu0 %v306
        %346 = vmatprep.subr.mxu0 0.0
        %347 = vmatpush2.msra.mxu0 0.0
        %348 = vmatprep.subr.mxu0 0.0
        %349 = vmatpush2.msra.mxu0 0.0
        %350 = vmatprep.subr.mxu0 0.0
        %351 = vmatpush2.msra.mxu0 0.0
        %352 = vmatprep.subr.mxu0 0.0
        %353 = vmatpush2.msra.mxu0 0.0
        %354 = vmatprep.subr.mxu0 0.0
        %355 = vmatpush2.msra.mxu0 0.0
        %356 = vmatprep.subr.mxu0 0.0
        %357 = vmatpush2.msra.mxu0 0.0
        %358 = vmatprep.subr.mxu0 0.0
        %359 = vmatpush2.msra.mxu0 0.0
        %360 = vmatprep.subr.mxu0 0.0
        %361 = vmatpush2.msra.mxu0 0.0
        %362 = vmatprep.subr.mxu0 0.0
        %363 = vmatpush2.msra.mxu0 0.0
        %364 = vmatprep.subr.mxu0 0.0
        %365 = vmatpush2.msra.mxu0 0.0
        %366 = vmatprep.subr.mxu0 0.0
        %367 = vmatpush2.msra.mxu0 0.0
        %368 = vmatprep.subr.mxu0 0.0
        %369 = vmatpush2.msra.mxu0 0.0
        %370 = vmatprep.subr.mxu0 0.0
        %371 = vmatpush2.msra.mxu0 0.0
        %372 = vmatprep.subr.mxu0 0.0
        %373 = vmatpush2.msra.mxu0 0.0
        %374 = vmatprep.subr.mxu0 0.0
        %375 = vmatpush2.msra.mxu0 0.0
        %376 = vmatprep.subr.mxu0 0.0
        %377 = vmatpush2.msra.mxu0 0.0
        %378 = vmatprep.mubr.f32.mxu0 0.0
        %379 = vmatmul.mubr.f32.gmra.mxu0 %v224
        %v380 = vpop.f32.mrf.mxu0
        %v381 = vadd.f32 0.0, %v380
        %v382 = vpop.f32.mrf.mxu0
        %383 = vmatprep.mubr.f32.mxu0 0.0
        %384 = vmatmul.mubr.f32.gmra.mxu0 %v227
        %v385 = vpop.f32.mrf.mxu0
        %v386 = vadd.f32 0.0, %v385
        %v387 = vpop.f32.mrf.mxu0
        %388 = vdwg.mxu0
        %s389 = scalar_lea.vmem [#allocation5], 128
        %v390 = vld [vmem:[%s389] sm:$0xff]
        %v391 = vld [vmem:[%s389 + $0x8] sm:$0xff]
        %v392 = vld [vmem:[%s389 + $0x10] sm:$0xff]
        %v393 = vld [vmem:[%s389 + $0x18] sm:$0xff]
        %v394 = vld [vmem:[%s389 + $0x20] sm:$0xff]
        %v395 = vld [vmem:[%s389 + $0x28] sm:$0xff]
        %v396 = vld [vmem:[%s389 + $0x30] sm:$0xff]
        %v397 = vld [vmem:[%s389 + $0x38] sm:$0xff]
        %398 = vmatprep.subr.mxu0 0.0
        %399 = vmatpush1.msra.mxu0 0.0
        %400 = vmatprep.subr.mxu0 0.0
        %401 = vmatpush1.msra.mxu0 0.0
        %402 = vmatprep.subr.mxu0 0.0
        %403 = vmatpush1.msra.mxu0 0.0
        %404 = vmatprep.subr.mxu0 0.0
        %405 = vmatpush1.msra.mxu0 0.0
        %406 = vmatprep.subr.mxu0 0.0
        %407 = vmatpush1.msra.mxu0 0.0
        %408 = vmatprep.subr.mxu0 0.0
        %409 = vmatpush1.msra.mxu0 0.0
        %410 = vmatprep.subr.mxu0 0.0
        %411 = vmatpush1.msra.mxu0 0.0
        %412 = vmatprep.subr.mxu0 0.0
        %413 = vmatpush1.msra.mxu0 0.0
        %414 = vmatprep.subr.mxu0 0.0
        %415 = vmatpush1.msra.mxu0 %v397
        %416 = vmatprep.subr.mxu0 0.0
        %417 = vmatpush1.msra.mxu0 %v396
        %418 = vmatprep.subr.mxu0 0.0
        %419 = vmatpush1.msra.mxu0 %v395
        %420 = vmatprep.subr.mxu0 0.0
        %421 = vmatpush1.msra.mxu0 %v394
        %422 = vmatprep.subr.mxu0 0.0
        %423 = vmatpush1.msra.mxu0 %v393
        %424 = vmatprep.subr.mxu0 0.0
        %425 = vmatpush1.msra.mxu0 %v392
        %426 = vmatprep.subr.mxu0 0.0
        %427 = vmatpush1.msra.mxu0 %v391
        %428 = vmatprep.subr.mxu0 0.0
        %429 = vmatpush1.msra.mxu0 %v390
        %430 = vmatprep.subr.mxu0 0.0
        %431 = vmatpush2.msra.mxu0 0.0
        %432 = vmatprep.subr.mxu0 0.0
        %433 = vmatpush2.msra.mxu0 0.0
        %434 = vmatprep.subr.mxu0 0.0
        %435 = vmatpush2.msra.mxu0 0.0
        %436 = vmatprep.subr.mxu0 0.0
        %437 = vmatpush2.msra.mxu0 0.0
        %438 = vmatprep.subr.mxu0 0.0
        %439 = vmatpush2.msra.mxu0 0.0
        %440 = vmatprep.subr.mxu0 0.0
        %441 = vmatpush2.msra.mxu0 0.0
        %442 = vmatprep.subr.mxu0 0.0
        %443 = vmatpush2.msra.mxu0 0.0
        %444 = vmatprep.subr.mxu0 0.0
        %445 = vmatpush2.msra.mxu0 0.0
        %446 = vmatprep.subr.mxu0 0.0
        %447 = vmatpush2.msra.mxu0 0.0
        %448 = vmatprep.subr.mxu0 0.0
        %449 = vmatpush2.msra.mxu0 0.0
        %450 = vmatprep.subr.mxu0 0.0
        %451 = vmatpush2.msra.mxu0 0.0
        %452 = vmatprep.subr.mxu0 0.0
        %453 = vmatpush2.msra.mxu0 0.0
        %454 = vmatprep.subr.mxu0 0.0
        %455 = vmatpush2.msra.mxu0 0.0
        %456 = vmatprep.subr.mxu0 0.0
        %457 = vmatpush2.msra.mxu0 0.0
        %458 = vmatprep.subr.mxu0 0.0
        %459 = vmatpush2.msra.mxu0 0.0
        %460 = vmatprep.subr.mxu0 0.0
        %461 = vmatpush2.msra.mxu0 0.0
        %462 = vmatprep.mubr.f32.mxu0 0.0
        %463 = vmatmul.mubr.f32.gmra.mxu0 %v224
        %v464 = vpop.f32.mrf.mxu0
        %v465 = vadd.f32 0.0, %v464
        %v466 = vpop.f32.mrf.mxu0
        %467 = vmatprep.mubr.f32.mxu0 0.0
        %468 = vmatmul.mubr.f32.gmra.mxu0 %v227
        %v469 = vpop.f32.mrf.mxu0
        %v470 = vadd.f32 0.0, %v469
        %v471 = vpop.f32.mrf.mxu0
        %472 = vdwg.mxu0
        %v473 = vlaneseq
        %v474 = vshrl.u32 %v473, 7
        %v475 = vadd.s32 %v474, 8
        %v476 = vlaneseq
        %v477 = vand.u32 %v476, 127
        %v478 = vsub.s32 %v474, 1
        %v479 = vsub.s32 %v475, 1
        %vm480 = vcmp.eq.s32.totalorder %v477, %v478
        %vm481 = vcmp.eq.s32.totalorder %v477, %v479
        %v482 = vsel %vm480, 1.0, 0.0
        %v483 = vsel %vm481, 1.0, 0.0
        %v484 = vadd.s32 %v474, 1
        %v485 = vadd.s32 %v475, 1
        %vm486 = vcmp.eq.s32.totalorder %v477, %v484
        %vm487 = vcmp.eq.s32.totalorder %v477, %v485
        %v488 = vsel %vm486, 1.0, 0.0
        %v489 = vsel %vm487, 1.0, 0.0
        %vm490 = vcmask 130048
        %v492 = vsel %vm490, %v482, 0
        %v495 = vsel %vm490, %v483, 0
        %497 = vmatprep.subr.mxu0 0.0
        %498 = vmatpush1.msra.mxu0 0.0
        %499 = vmatprep.subr.mxu0 0.0
        %500 = vmatpush1.msra.mxu0 0.0
        %501 = vmatprep.subr.mxu0 0.0
        %502 = vmatpush1.msra.mxu0 0.0
        %503 = vmatprep.subr.mxu0 0.0
        %504 = vmatpush1.msra.mxu0 0.0
        %505 = vmatprep.subr.mxu0 0.0
        %506 = vmatpush1.msra.mxu0 0.0
        %507 = vmatprep.subr.mxu0 0.0
        %508 = vmatpush1.msra.mxu0 0.0
        %509 = vmatprep.subr.mxu0 0.0
        %510 = vmatpush1.msra.mxu0 0.0
        %511 = vmatprep.subr.mxu0 0.0
        %512 = vmatpush1.msra.mxu0 0.0
        %513 = vmatprep.subr.mxu0 0.0
        %514 = vmatpush1.msra.mxu0 0.0
        %515 = vmatprep.subr.mxu0 0.0
        %516 = vmatpush1.msra.mxu0 0.0
        %517 = vmatprep.subr.mxu0 0.0
        %518 = vmatpush1.msra.mxu0 0.0
        %519 = vmatprep.subr.mxu0 0.0
        %520 = vmatpush1.msra.mxu0 0.0
        %521 = vmatprep.subr.mxu0 0.0
        %522 = vmatpush1.msra.mxu0 0.0
        %523 = vmatprep.subr.mxu0 0.0
        %524 = vmatpush1.msra.mxu0 0.0
        %525 = vmatprep.subr.mxu0 0.0
        %526 = vmatpush1.msra.mxu0 %v386
        %527 = vmatprep.subr.mxu0 0.0
        %528 = vmatpush1.msra.mxu0 %v381
        %529 = vmatprep.subr.mxu0 0.0
        %530 = vmatpush2.msra.mxu0 0.0
        %531 = vmatprep.subr.mxu0 0.0
        %532 = vmatpush2.msra.mxu0 0.0
        %533 = vmatprep.subr.mxu0 0.0
        %534 = vmatpush2.msra.mxu0 0.0
        %535 = vmatprep.subr.mxu0 0.0
        %536 = vmatpush2.msra.mxu0 0.0
        %537 = vmatprep.subr.mxu0 0.0
        %538 = vmatpush2.msra.mxu0 0.0
        %539 = vmatprep.subr.mxu0 0.0
        %540 = vmatpush2.msra.mxu0 0.0
        %541 = vmatprep.subr.mxu0 0.0
        %542 = vmatpush2.msra.mxu0 0.0
        %543 = vmatprep.subr.mxu0 0.0
        %544 = vmatpush2.msra.mxu0 0.0
        %545 = vmatprep.subr.mxu0 0.0
        %546 = vmatpush2.msra.mxu0 0.0
        %547 = vmatprep.subr.mxu0 0.0
        %548 = vmatpush2.msra.mxu0 0.0
        %549 = vmatprep.subr.mxu0 0.0
        %550 = vmatpush2.msra.mxu0 0.0
        %551 = vmatprep.subr.mxu0 0.0
        %552 = vmatpush2.msra.mxu0 0.0
        %553 = vmatprep.subr.mxu0 0.0
        %554 = vmatpush2.msra.mxu0 0.0
        %555 = vmatprep.subr.mxu0 0.0
        %556 = vmatpush2.msra.mxu0 0.0
        %557 = vmatprep.subr.mxu0 0.0
        %558 = vmatpush2.msra.mxu0 0.0
        %559 = vmatprep.subr.mxu0 0.0
        %560 = vmatpush2.msra.mxu0 0.0
        %561 = vmatprep.mubr.f32.mxu0 0.0
        %562 = vmatmul.mubr.f32.gmra.mxu0 %v492
        %v563 = vpop.f32.mrf.mxu0
        %v564 = vadd.f32 0.0, %v563
        %v565 = vpop.f32.mrf.mxu0
        %566 = vmatprep.mubr.f32.mxu0 0.0
        %567 = vmatmul.mubr.f32.gmra.mxu0 %v495
        %v568 = vpop.f32.mrf.mxu0
        %v569 = vadd.f32 0.0, %v568
        %v570 = vpop.f32.mrf.mxu0
        %571 = vdwg.mxu0
        %v572 = vadd.f32 %v304, %v564
        %v573 = vadd.f32 %v305, %v569
        %v575 = vsel %vm490, %v488, 0
        %v578 = vsel %vm490, %v489, 0
        %580 = vmatprep.subr.mxu0 0.0
        %581 = vmatpush1.msra.mxu0 0.0
        %582 = vmatprep.subr.mxu0 0.0
        %583 = vmatpush1.msra.mxu0 0.0
        %584 = vmatprep.subr.mxu0 0.0
        %585 = vmatpush1.msra.mxu0 0.0
        %586 = vmatprep.subr.mxu0 0.0
        %587 = vmatpush1.msra.mxu0 0.0
        %588 = vmatprep.subr.mxu0 0.0
        %589 = vmatpush1.msra.mxu0 0.0
        %590 = vmatprep.subr.mxu0 0.0
        %591 = vmatpush1.msra.mxu0 0.0
        %592 = vmatprep.subr.mxu0 0.0
        %593 = vmatpush1.msra.mxu0 0.0
        %594 = vmatprep.subr.mxu0 0.0
        %595 = vmatpush1.msra.mxu0 0.0
        %596 = vmatprep.subr.mxu0 0.0
        %597 = vmatpush1.msra.mxu0 0.0
        %598 = vmatprep.subr.mxu0 0.0
        %599 = vmatpush1.msra.mxu0 0.0
        %600 = vmatprep.subr.mxu0 0.0
        %601 = vmatpush1.msra.mxu0 0.0
        %602 = vmatprep.subr.mxu0 0.0
        %603 = vmatpush1.msra.mxu0 0.0
        %604 = vmatprep.subr.mxu0 0.0
        %605 = vmatpush1.msra.mxu0 0.0
        %606 = vmatprep.subr.mxu0 0.0
        %607 = vmatpush1.msra.mxu0 0.0
        %608 = vmatprep.subr.mxu0 0.0
        %609 = vmatpush1.msra.mxu0 %v470
        %610 = vmatprep.subr.mxu0 0.0
        %611 = vmatpush1.msra.mxu0 %v465
        %612 = vmatprep.subr.mxu0 0.0
        %613 = vmatpush2.msra.mxu0 0.0
        %614 = vmatprep.subr.mxu0 0.0
        %615 = vmatpush2.msra.mxu0 0.0
        %616 = vmatprep.subr.mxu0 0.0
        %617 = vmatpush2.msra.mxu0 0.0
        %618 = vmatprep.subr.mxu0 0.0
        %619 = vmatpush2.msra.mxu0 0.0
        %620 = vmatprep.subr.mxu0 0.0
        %621 = vmatpush2.msra.mxu0 0.0
        %622 = vmatprep.subr.mxu0 0.0
        %623 = vmatpush2.msra.mxu0 0.0
        %624 = vmatprep.subr.mxu0 0.0
        %625 = vmatpush2.msra.mxu0 0.0
        %626 = vmatprep.subr.mxu0 0.0
        %627 = vmatpush2.msra.mxu0 0.0
        %628 = vmatprep.subr.mxu0 0.0
        %629 = vmatpush2.msra.mxu0 0.0
        %630 = vmatprep.subr.mxu0 0.0
        %631 = vmatpush2.msra.mxu0 0.0
        %632 = vmatprep.subr.mxu0 0.0
        %633 = vmatpush2.msra.mxu0 0.0
        %634 = vmatprep.subr.mxu0 0.0
        %635 = vmatpush2.msra.mxu0 0.0
        %636 = vmatprep.subr.mxu0 0.0
        %637 = vmatpush2.msra.mxu0 0.0
        %638 = vmatprep.subr.mxu0 0.0
        %639 = vmatpush2.msra.mxu0 0.0
        %640 = vmatprep.subr.mxu0 0.0
        %641 = vmatpush2.msra.mxu0 0.0
        %642 = vmatprep.subr.mxu0 0.0
        %643 = vmatpush2.msra.mxu0 0.0
        %644 = vmatprep.mubr.f32.mxu0 0.0
        %645 = vmatmul.mubr.f32.gmra.mxu0 %v575
        %v646 = vpop.f32.mrf.mxu0
        %v647 = vadd.f32 0.0, %v646
        %v648 = vpop.f32.mrf.mxu0
        %649 = vmatprep.mubr.f32.mxu0 0.0
        %650 = vmatmul.mubr.f32.gmra.mxu0 %v578
        %v651 = vpop.f32.mrf.mxu0
        %v652 = vadd.f32 0.0, %v651
        %v653 = vpop.f32.mrf.mxu0
        %654 = vdwg.mxu0
        %v655 = vadd.f32 %v572, %v647
        %v656 = vadd.f32 %v573, %v652
        %657 = vst.msk [vmem:[%s203] sm:$0xff] %vm222, %v655
        %658 = vst.msk [vmem:[%s203 + $0x8] sm:$0xff] %vm222, %v656
        %s659 = sand.u32 %s97, 1
        %s660 = scalar_lea.sflag [#allocation4], %s659
        %s661 = sand.u32 %s97, 1
        %s662 = smul.addr %s661, 16
        %s663 = scalar_lea.vmem [#allocation7], %s662
        // Predicated region
        $region41: #{tpu_custom_call.1} parent=31 // pred_check
          %p664 = pneg %p107
        $region42: #{tpu_custom_call.1} parent=31 // pred_check_branch
          %666 = sbr.rel (%p664) target = $region44
        $region43: #{tpu_custom_call.1} parent=31 // pred_region
          %s668 = ssub.s32 256, 256
          %669 = vsyncadd %s660, %s668
          %s670 = smul.addr %s21, 2
          %s671 = smul.addr %s670, 128
          %s672 = scalar_lea.hbm %s3, %s671
          %s673 = sshll.u32 %s663, 4
          %s674 = int_to_ptr.vmem [resolvable:$true] %s673
          %679 = dma.vmem_to_hbm [thread:$0]  %s674, 256, %s672, %s660, 128, 128, 8
        $region44: #{tpu_custom_call.1} parent=31 // pred_fallthru
          _
      $region32: #{tpu_custom_call.1} parent=5 // pred_fallthru
        _
      %p680 = scmp.le.s32.totalorder 2, %s16
      // Predicated region
      $region45: #{tpu_custom_call.1} parent=5 // pred_check
        %p681 = pneg %p680
      $region46: #{tpu_custom_call.1} parent=5 // pred_check_branch
        %683 = sbr.rel (%p681) target = $region48
      $region47: #{tpu_custom_call.1} parent=5 // pred_region
        %s684 = ssub.s32 %s16, 2
        // Predicated region
        $region49: #{tpu_custom_call.1} parent=47 // pred_check
          %p685 = pneg %p113
        $region50: #{tpu_custom_call.1} parent=47 // pred_check_branch
          %687 = sbr.rel (%p685) target = $region52
        $region51: #{tpu_custom_call.1} parent=47 // pred_region
          %s688 = sand.u32 %s98, 1
          %s689 = scalar_lea.sflag [#allocation4], %s688
          %s690 = sand.u32 %s98, 1
          %s691 = smul.addr %s690, 16
          %s692 = scalar_lea.vmem [#allocation7], %s691
          %693 = dma.done %s689, 256
        $region52: #{tpu_custom_call.1} parent=47 // pred_fallthru
          _
      $region48: #{tpu_custom_call.1} parent=5 // pred_fallthru
        _
    $region6: #{tpu_custom_call.1} parent=1 // loop_footer
      %s20 = sadd.s32 1, %s16
    $region7: #{tpu_custom_call.1} parent=1 // loop_footer_branch
      %15 = sbr.rel target = $region3
    $region8: #{tpu_custom_call.1} parent=1 // loop_exit
      _
    %694 = vsyncpa [#allocation3], 1
    %s695 = scalar_lea.sflag [#allocation3], 1
    %696 = vsyncpa %s695, 1
    %697 = vsyncpa [#allocation6], 1
    %698 = vsyncpa [#allocation4], 1
    %s699 = scalar_lea.sflag [#allocation4], 1
    %700 = vsyncpa %s699, 1

</llo_original>
